<compile_context>
chip_gen: v7x
topology: tpu7x:2x2x1
jax: 0.10.0
libtpu: 0.0.40
codegen_flags: <defaults>
</compile_context>

<pallas_src>
import math
from functools import partial

import jax
import jax.numpy as jnp
from jax.experimental import pallas as pl
from jax.experimental.pallas import tpu as pltpu


# ----------------------------- Pallas kernel ------------------------------ #

def _grouped_mlp_l2norm_kernel(gid_ref, x_ref, w1_ref, b1_ref, w2_ref, b2_ref,
                               o_ref):
    """One row tile of:  l2norm( relu(x @ W1[g] + b1[g]) @ W2[g] + b2[g] ).

    gid_ref (SMEM, scalar-prefetched) holds the per-tile group/feature id; it
    is consumed only by the weight index_maps, so the body just uses whatever
    W/b blocks Pallas staged for this step."""
    del gid_ref

    x = x_ref[...]                                             # [tm, Cp]  bf16

    # Linear 1 + ReLU (bf16 MXU, f32 accumulate; bias + relu in f32 on the VPU)
    h = jnp.dot(x, w1_ref[...], preferred_element_type=jnp.float32)
    h = jnp.maximum(h + b1_ref[...], 0.0)                      # [tm, NCp] f32

    # Linear 2 (bf16 MXU, f32 accumulate)
    y = jnp.dot(h.astype(jnp.bfloat16), w2_ref[...],
                preferred_element_type=jnp.float32)
    y = y + b2_ref[...]                                        # [tm, NCp] f32

    # LNorm(power=2): y / (||y||_2 + 1e-7).  Padded nc columns of y are exactly
    # zero (zero W2 columns / zero b2), so the norm of the real columns is
    # unchanged.  approx reciprocal (EUP) + one Newton step => ~f32 accuracy.
    norm = jnp.sqrt(jnp.sum(y * y, axis=-1, keepdims=True)) + 1e-7
    inv = pl.reciprocal(norm, approx=True)
    inv = inv * (2.0 - norm * inv)
    o_ref[...] = (y * inv).astype(o_ref.dtype)


# ------------------------------ Host wrapper ------------------------------- #

def _round_up(x, m):
    return ((x + m - 1) // m) * m


def _num_tensorcores():
    """Best-effort TensorCore count per device (v7x = 2, v5e/v6e = 1)."""
    try:
        dev = jax.devices()[0]
        kind = str(getattr(dev, "device_kind", "")).lower()
        if "v7" in kind:
            return 2
        n = getattr(dev, "num_cores", None)
        n = int(n) if n else 1
        return max(1, min(2, n))
    except Exception:  # pragma: no cover - defensive
        return 1


def _pick_row_tile(rows_per_feature, n_cores):
    """Row-tile heuristic:
       * multiples of 16 (bf16 sublane packing),
       * capped at 512 (amortizes ~0.35us/step, keeps VMEM footprint small),
       * on megacore parts aim for >=2 grid steps per TensorCore so writeback /
         next-tile prefetch overlaps compute; on single-TC chips use the
         fewest steps (overhead-dominated regime)."""
    rows = max(rows_per_feature) if rows_per_feature else 16
    if n_cores >= 2:
        tm = max(16, rows // (2 * n_cores))
    else:
        tm = rows
    tm = min(512, tm)
    tm = max(16, (tm // 16) * 16)
    return tm


@partial(jax.jit, static_argnames=("tm", "c_pad", "nc", "out_dtype"))
def _fused_forward(feats, sel_ids, w1s, b1s, w2s, b2s, *, tm, c_pad, nc,
                   out_dtype):
    """Gather + pack all features and run ONE grouped Pallas launch.

    feats:   tuple of [B, C_i, *spatial] arrays.
    sel_ids: tuple of per-feature token-id arrays (or None -> take all tokens).
    Weights are pre-padded / pre-cast, stacked per feature ("group").
    Returns a tuple of [rows_i, nc] arrays."""
    nc_pad = w1s.shape[-1]

    xs, gids, rows_list, rows_pad_list = [], [], [], []
    for i, feat in enumerate(feats):
        b, c = feat.shape[0], feat.shape[1]
        feat_bc_t = feat.reshape(b, c, -1)                       # [B, C, T]
        pid = sel_ids[i]
        if pid is not None:
            # Gather BEFORE transposing: only the [B, C, P] slab is permuted.
            feat_bc_p = jnp.take(feat_bc_t, pid, axis=2)         # [B, C, P]
        else:
            feat_bc_p = feat_bc_t                                # all tokens
        x_i = jnp.transpose(feat_bc_p, (0, 2, 1)).reshape(-1, c)  # [B*P, C]

        rows = x_i.shape[0]
        rows_pad = _round_up(rows, tm)
        x_pad = jnp.zeros((rows_pad, c_pad), jnp.bfloat16)
        x_pad = x_pad.at[:rows, :c].set(x_i.astype(jnp.bfloat16))

        xs.append(x_pad)
        gids.append(jnp.full((rows_pad // tm,), i, dtype=jnp.int32))
        rows_list.append(rows)
        rows_pad_list.append(rows_pad)

    x_all = jnp.concatenate(xs, axis=0)                          # [N_pad, Cp]
    gid_all = jnp.concatenate(gids, axis=0)                      # [n_tiles]
    n_pad = x_all.shape[0]
    n_tiles = n_pad // tm

    out = pl.pallas_call(
        _grouped_mlp_l2norm_kernel,
        out_shape=jax.ShapeDtypeStruct((n_pad, nc_pad), out_dtype),
        grid_spec=pltpu.PrefetchScalarGridSpec(
            num_scalar_prefetch=1,                 # gid_all -> SMEM
            grid=(n_tiles,),
            in_specs=[
                # x row tile
                pl.BlockSpec((tm, c_pad), lambda i, gid: (i, 0)),
                # per-group weights / biases, selected by the prefetched gid;
                # consecutive tiles of the same group keep the block resident.
                pl.BlockSpec((None, c_pad, nc_pad),
                             lambda i, gid: (gid[i], 0, 0)),
                pl.BlockSpec((None, 1, nc_pad),
                             lambda i, gid: (gid[i], 0, 0)),
                pl.BlockSpec((None, nc_pad, nc_pad),
                             lambda i, gid: (gid[i], 0, 0)),
                pl.BlockSpec((None, 1, nc_pad),
                             lambda i, gid: (gid[i], 0, 0)),
            ],
            out_specs=pl.BlockSpec((tm, nc_pad), lambda i, gid: (i, 0)),
        ),
        compiler_params=pltpu.CompilerParams(
            dimension_semantics=("parallel",)),
        # VMEM footprint ~ a few MiB at tm=512, nc_pad=256: far below the
        # 32 MiB scoped limit even on v7x, so no vmem_limit_bytes override.
    )(gid_all, x_all, w1s, b1s, w2s, b2s)

    # Slice per-feature outputs (static offsets).
    outs, off = [], 0
    for rows, rows_pad in zip(rows_list, rows_pad_list):
        outs.append(out[off:off + rows, :nc])
        off += rows_pad
    return tuple(outs)


# ------------------------------ Module glue ------------------------------- #

def init_feature_patch_mlp(key, channels_per_feature, nc=256):
    """Deterministic synthetic f32 parameters for each per-feature MLP."""
    params = []
    for input_nc in channels_per_feature:
        key, k1, k2, k3, k4 = jax.random.split(key, 5)
        w1 = jax.random.normal(k1, (input_nc, nc), jnp.float32) / jnp.sqrt(input_nc)
        b1 = jax.random.normal(k2, (1, nc), jnp.float32) * 0.01
        w2 = jax.random.normal(k3, (nc, nc), jnp.float32) / jnp.sqrt(nc)
        b2 = jax.random.normal(k4, (1, nc), jnp.float32) * 0.01
        params.append((w1, b1, w2, b2))
    return params


def pack_params(params):
    """One-time padding + bf16 cast of the MLP weights (constants across calls).

    Returns stacked, padded tensors suitable for the grouped Pallas kernel:
      w1s: [n_feat, c_pad, nc_pad] bf16   b1s: [n_feat, 1, nc_pad] f32
      w2s: [n_feat, nc_pad, nc_pad] bf16  b2s: [n_feat, 1, nc_pad] f32
    Zero padding is mathematically inert (padded K columns of x are zero,
    padded output columns are exactly zero)."""
    n_feat = len(params)
    nc = params[0][0].shape[1]
    c_pad = max(_round_up(w1.shape[0], 128) for (w1, _, _, _) in params)
    nc_pad = _round_up(nc, 128)

    w1s = jnp.zeros((n_feat, c_pad, nc_pad), jnp.bfloat16)
    b1s = jnp.zeros((n_feat, 1, nc_pad), jnp.float32)
    w2s = jnp.zeros((n_feat, nc_pad, nc_pad), jnp.bfloat16)
    b2s = jnp.zeros((n_feat, 1, nc_pad), jnp.float32)
    for i, (w1, b1, w2, b2) in enumerate(params):
        c_i = w1.shape[0]
        w1s = w1s.at[i, :c_i, :nc].set(w1.astype(jnp.bfloat16))
        b1s = b1s.at[i, :, :nc].set(b1.astype(jnp.float32))
        w2s = w2s.at[i, :nc, :nc].set(w2.astype(jnp.bfloat16))
        b2s = b2s.at[i, :, :nc].set(b2.astype(jnp.float32))

    return {"w1s": w1s, "b1s": b1s, "w2s": w2s, "b2s": b2s,
            "c_pad": c_pad, "nc": nc, "nc_pad": nc_pad}


def feature_patch_mlp_forward(feats, packed_params, num_patches=256,
                              patch_ids=None, rng_key=None,
                              out_dtype=jnp.float32):
    """Mirrors FeaturePatchMLP.forward.

    feats: list of arrays, NCHW ([B,C,H,W]) or NCDHW ([B,C,D,H,W]).
    Returns (return_feats, return_ids): list of [B*P, nc] arrays, list of ids.
    """
    if rng_key is None:
        rng_key = jax.random.PRNGKey(0)

    sel_ids = []       # token ids to gather (None -> all tokens, no gather)
    return_ids = []    # what the module returns (mirrors PyTorch behaviour)
    for i, feat in enumerate(feats):
        n_tokens = math.prod(int(d) for d in feat.shape[2:])
        if num_patches > 0:
            if patch_ids is not None:
                pid = patch_ids[i]
            else:
                rng_key, sub = jax.random.split(rng_key)
                perm = jax.random.permutation(sub, n_tokens)
                pid = perm[: int(min(num_patches, n_tokens))]
            sel_ids.append(pid)
            return_ids.append(pid)
        else:
            sel_ids.append(None)                       # take all tokens
            return_ids.append(jnp.zeros((0,), jnp.int32))

    rows_per_feature = [
        int(feat.shape[0]) * (int(sel_ids[i].shape[0]) if sel_ids[i] is not None
                              else math.prod(int(d) for d in feat.shape[2:]))
        for i, feat in enumerate(feats)
    ]
    tm = _pick_row_tile(rows_per_feature, _num_tensorcores())

    outs = _fused_forward(
        tuple(feats), tuple(sel_ids),
        packed_params["w1s"], packed_params["b1s"],
        packed_params["w2s"], packed_params["b2s"],
        tm=tm, c_pad=packed_params["c_pad"], nc=packed_params["nc"],
        out_dtype=out_dtype)

    return list(outs), return_ids


# Pure-JAX f32 reference for the correctness check of the kernel.
def _reference(x, w1, b1, w2, b2):
    h = jnp.maximum(x @ w1 + b1, 0.0)
    y = h @ w2 + b2
    norm = jnp.sqrt(jnp.sum(y * y, axis=-1, keepdims=True))
    return y / (norm + 1e-7)


# --------------------------------- Main ------------------------------------ #

if __name__ == "__main__":
    key = jax.random.PRNGKey(0)

    # Small shapes consistent with the module: two generator feature maps at
    # different depths (different channel counts).
    B, H, W = 2, 16, 16
    channels_per_feature = (4, 8)
    nc = 32
    num_patches = 8          # B * num_patches = 16 rows per feature

    key, kf1, kf2, kp, kfwd = jax.random.split(key, 5)
    feats = [
        jax.random.normal(kf1, (B, channels_per_feature[0], H, W), jnp.float32),
        jax.random.normal(kf2, (B, channels_per_feature[1], H, W), jnp.float32),
    ]

    params = init_feature_patch_mlp(kp, channels_per_feature, nc=nc)
    packed = pack_params(params)                       # one-time pad/cast

    out_feats, out_ids = feature_patch_mlp_forward(
        feats, packed, num_patches=num_patches, patch_ids=None, rng_key=kfwd)
    for o in out_feats:
        jax.block_until_ready(o)

    # Correctness: kernel output vs plain-JAX f32 reference on the same rows.
    # Tolerance is relaxed because MXU inputs are bf16 (documented precision
    # choice for this contrastive feature head).
    ok = True
    for i, feat in enumerate(feats):
        c = feat.shape[1]
        feat_flat = jnp.transpose(feat, (0, 2, 3, 1)).reshape(B, -1, c)
        feat_patch = feat_flat[:, out_ids[i], :].reshape(-1, c)
        ref = _reference(feat_patch, *params[i])
        if not jnp.allclose(out_feats[i].astype(jnp.float32), ref,
                            atol=3e-2, rtol=3e-2):
            ok = False
    assert ok, "Pallas kernel mismatch vs reference"

    # Shape check: [B * num_patches, nc]
    assert all(o.shape == (B * num_patches, nc) for o in out_feats)

    # Rows are unit-norm after LNorm(2) (approx recip + Newton step).
    for o in out_feats:
        norms = jnp.sqrt(jnp.sum(o.astype(jnp.float32) ** 2, axis=-1))
        assert jnp.allclose(norms, 1.0, atol=1e-2), "L2 norm check failed"

    # Exercise the num_patches == 0 (all-tokens, gather-free) path once.
    out_all, ids_all = feature_patch_mlp_forward(feats, packed, num_patches=0)
    for o in out_all:
        jax.block_until_ready(o)
    assert out_all[0].shape == (B * H * W, nc)
    assert out_all[1].shape == (B * H * W, nc)
    assert all(int(i.shape[0]) == 0 for i in ids_all)
    assert all(bool(jnp.all(jnp.isfinite(o))) for o in out_all)

    print("KERNEL_OK")
</pallas_src>

<mosaic_0001>
module attributes {stable_mosaic.version = 11 : i64} {
  func.func @_grouped_mlp_l2norm_kernel(%arg0: i32, %arg1: memref<2xi32, #tpu.memory_space<smem>>, %arg2: memref<16x128xbf16, #tpu.memory_space<vmem>>, %arg3: memref<1x128x128xbf16, #tpu.memory_space<vmem>>, %arg4: memref<1x1x128xf32, #tpu.memory_space<vmem>>, %arg5: memref<1x128x128xbf16, #tpu.memory_space<vmem>>, %arg6: memref<1x1x128xf32, #tpu.memory_space<vmem>>, %arg7: memref<16x128xf32, #tpu.memory_space<vmem>>) attributes {dimension_semantics = [#tpu.dimension_semantics<parallel>], iteration_bounds = array<i64: 2>, scalar_prefetch = 1 : i64, scratch_operands = 0 : i64, tpu.core_type = #tpu.core_type<tc>, window_params = [{transform_indices = @transform_0, window_bounds = array<i64: 16, 128>}, {transform_indices = @transform_1, window_bounds = array<i64: 1, 128, 128>}, {transform_indices = @transform_2, window_bounds = array<i64: 1, 1, 128>}, {transform_indices = @transform_3, window_bounds = array<i64: 1, 128, 128>}, {transform_indices = @transform_4, window_bounds = array<i64: 1, 1, 128>}, {transform_indices = @transform_5, window_bounds = array<i64: 16, 128>}]} {
    %c0 = arith.constant 0 : index
    %c0_0 = arith.constant 0 : index
    %0 = vector.load %arg2[%c0, %c0_0] : memref<16x128xbf16, #tpu.memory_space<vmem>>, vector<16x128xbf16>
    %c0_1 = arith.constant 0 : index
    %c0_2 = arith.constant 0 : index
    %c0_3 = arith.constant 0 : index
    %1 = vector.load %arg3[%c0_1, %c0_2, %c0_3] : memref<1x128x128xbf16, #tpu.memory_space<vmem>>, vector<1x128x128xbf16>
    %2 = vector.shape_cast %1 : vector<1x128x128xbf16> to vector<128x128xbf16>
    %cst = arith.constant dense<0.000000e+00> : vector<16x128xf32>
    %3 = tpu.matmul %0, %2, %cst {dimension_numbers = #tpu.dot_dimension_numbers<[1], [0], [0], [1], [0, 0, 1, 1], [], []>} : vector<16x128xbf16>, vector<128x128xbf16>, vector<16x128xf32> -> vector<16x128xf32>
    %c0_4 = arith.constant 0 : index
    %c0_5 = arith.constant 0 : index
    %c0_6 = arith.constant 0 : index
    %4 = vector.load %arg4[%c0_4, %c0_5, %c0_6] : memref<1x1x128xf32, #tpu.memory_space<vmem>>, vector<1x1x128xf32>
    %5 = vector.shape_cast %4 : vector<1x1x128xf32> to vector<1x128xf32>
    %6 = vector.broadcast %5 : vector<1x128xf32> to vector<16x128xf32>
    %7 = arith.addf %3, %6 : vector<16x128xf32>
    %cst_7 = arith.constant 0.000000e+00 : f32
    %8 = vector.broadcast %cst_7 : f32 to vector<16x128xf32>
    %9 = arith.maximumf %7, %8 : vector<16x128xf32>
    %10 = arith.truncf %9 : vector<16x128xf32> to vector<16x128xbf16>
    %c0_8 = arith.constant 0 : index
    %c0_9 = arith.constant 0 : index
    %c0_10 = arith.constant 0 : index
    %11 = vector.load %arg5[%c0_8, %c0_9, %c0_10] : memref<1x128x128xbf16, #tpu.memory_space<vmem>>, vector<1x128x128xbf16>
    %12 = vector.shape_cast %11 : vector<1x128x128xbf16> to vector<128x128xbf16>
    %cst_11 = arith.constant dense<0.000000e+00> : vector<16x128xf32>
    %13 = tpu.matmul %10, %12, %cst_11 {dimension_numbers = #tpu.dot_dimension_numbers<[1], [0], [0], [1], [0, 0, 1, 1], [], []>} : vector<16x128xbf16>, vector<128x128xbf16>, vector<16x128xf32> -> vector<16x128xf32>
    %c0_12 = arith.constant 0 : index
    %c0_13 = arith.constant 0 : index
    %c0_14 = arith.constant 0 : index
    %14 = vector.load %arg6[%c0_12, %c0_13, %c0_14] : memref<1x1x128xf32, #tpu.memory_space<vmem>>, vector<1x1x128xf32>
    %15 = vector.shape_cast %14 : vector<1x1x128xf32> to vector<1x128xf32>
    %16 = vector.broadcast %15 : vector<1x128xf32> to vector<16x128xf32>
    %17 = arith.addf %13, %16 : vector<16x128xf32>
    %18 = arith.mulf %17, %17 : vector<16x128xf32>
    %cst_15 = arith.constant dense<0.000000e+00> : vector<16xf32>
    %19 = vector.multi_reduction <add>, %18, %cst_15 [1] : vector<16x128xf32> to vector<16xf32>
    %20 = vector.shape_cast %19 : vector<16xf32> to vector<16x1xf32>
    %21 = math.sqrt %20 : vector<16x1xf32>
    %cst_16 = arith.constant 1.000000e-07 : f32
    %22 = vector.broadcast %cst_16 : f32 to vector<16x1xf32>
    %23 = arith.addf %21, %22 : vector<16x1xf32>
    %24 = tpu.reciprocal %23 {approx = true} : vector<16x1xf32> -> vector<16x1xf32>
    %25 = arith.mulf %23, %24 : vector<16x1xf32>
    %cst_17 = arith.constant 2.000000e+00 : f32
    %26 = vector.broadcast %cst_17 : f32 to vector<16x1xf32>
    %27 = arith.subf %26, %25 : vector<16x1xf32>
    %28 = arith.mulf %24, %27 : vector<16x1xf32>
    %29 = vector.broadcast %28 : vector<16x1xf32> to vector<16x128xf32>
    %30 = arith.mulf %17, %29 : vector<16x128xf32>
    %c0_18 = arith.constant 0 : index
    %c0_19 = arith.constant 0 : index
    %31 = vector.load %arg7[%c0_18, %c0_19] : memref<16x128xf32, #tpu.memory_space<vmem>>, vector<16x128xf32>
    tpu.vector_store %arg7[%c0_18, %c0_19], %30 {strides = array<i32>} : memref<16x128xf32, #tpu.memory_space<vmem>>, vector<16x128xf32>,
    return
  }
  func.func @transform_0(%arg0: i32, %arg1: memref<2xi32, #tpu.memory_space<smem>>) -> (i32, i32) {
    %c0_i32 = arith.constant 0 : i32
    %c0_i32_0 = arith.constant 0 : i32
    return %arg0, %c0_i32 : i32, i32
  }
  func.func @transform_1(%arg0: i32, %arg1: memref<2xi32, #tpu.memory_space<smem>>) -> (i32, i32, i32) {
    %0 = arith.index_cast %arg0 : i32 to index
    %1 = memref.load %arg1[%0] : memref<2xi32, #tpu.memory_space<smem>>
    %c0_i32 = arith.constant 0 : i32
    %c0_i32_0 = arith.constant 0 : i32
    %c0_i32_1 = arith.constant 0 : i32
    return %1, %c0_i32, %c0_i32_0 : i32, i32, i32
  }
  func.func @transform_2(%arg0: i32, %arg1: memref<2xi32, #tpu.memory_space<smem>>) -> (i32, i32, i32) {
    %0 = arith.index_cast %arg0 : i32 to index
    %1 = memref.load %arg1[%0] : memref<2xi32, #tpu.memory_space<smem>>
    %c0_i32 = arith.constant 0 : i32
    %c0_i32_0 = arith.constant 0 : i32
    %c0_i32_1 = arith.constant 0 : i32
    return %1, %c0_i32, %c0_i32_0 : i32, i32, i32
  }
  func.func @transform_3(%arg0: i32, %arg1: memref<2xi32, #tpu.memory_space<smem>>) -> (i32, i32, i32) {
    %0 = arith.index_cast %arg0 : i32 to index
    %1 = memref.load %arg1[%0] : memref<2xi32, #tpu.memory_space<smem>>
    %c0_i32 = arith.constant 0 : i32
    %c0_i32_0 = arith.constant 0 : i32
    %c0_i32_1 = arith.constant 0 : i32
    return %1, %c0_i32, %c0_i32_0 : i32, i32, i32
  }
  func.func @transform_4(%arg0: i32, %arg1: memref<2xi32, #tpu.memory_space<smem>>) -> (i32, i32, i32) {
    %0 = arith.index_cast %arg0 : i32 to index
    %1 = memref.load %arg1[%0] : memref<2xi32, #tpu.memory_space<smem>>
    %c0_i32 = arith.constant 0 : i32
    %c0_i32_0 = arith.constant 0 : i32
    %c0_i32_1 = arith.constant 0 : i32
    return %1, %c0_i32, %c0_i32_0 : i32, i32, i32
  }
  func.func @transform_5(%arg0: i32, %arg1: memref<2xi32, #tpu.memory_space<smem>>) -> (i32, i32) {
    %c0_i32 = arith.constant 0 : i32
    %c0_i32_0 = arith.constant 0 : i32
    return %arg0, %c0_i32 : i32, i32
  }
}

</mosaic_0001>

<llo_original>
// kernel: _fused_forward.1
$region0: #{_fused_forward.1}
  #allocation0 [shape = 'u32[]', space=smem, size = 0x4, offset = 0x4, fixed_abs, tag = 'smem constant byte address 0x4 - core index']
  #allocation1 [shape = 'u32[144,128]{1,0:T(1,128)}', space=vmem, size = 0x12000, scoped, tag = 'internal scratch']
  #allocation2 [shape = 's32[1]{0}', space=sflag, size = 0x4, scoped, tag = 'scoped memory for _fused_forward.1']
  #allocation3 [shape = 'u8[512]{0}', space=smem, size = 0x200, scoped, tag = 'prefetched SMEM operand 0']
  %s0 = inlined_call_operand.vmem [shape: s32[2], index: 0, kind: input, shape index: {}]
  %s1 = inlined_call_operand.vmem [shape: bf16[32,128], index: 1, kind: input, shape index: {}]
  %s2 = inlined_call_operand.vmem [shape: bf16[2,128,128], index: 2, kind: input, shape index: {}]
  %s3 = inlined_call_operand.vmem [shape: f32[2,1,128], index: 3, kind: input, shape index: {}]
  %s4 = inlined_call_operand.vmem [shape: bf16[2,128,128], index: 4, kind: input, shape index: {}]
  %s5 = inlined_call_operand.vmem [shape: f32[2,1,128], index: 5, kind: input, shape index: {}]
  %s6 = inlined_call_operand.vmem [shape: f32[32,128], index: 6, kind: output, shape index: {}]
  %s7 = sld [smem:[#allocation0]]
  $region53: #{_fused_forward.1} parent=0
    _
  %s9 = ssub.s32 1, %s7
  %s10 = scalar_select 0, %s9, %s7
  %s11 = sshll.u32 %s0, 4
  %s12 = int_to_ptr.vmem [resolvable:$true] %s11
  %14 = dma.vmem_to_smem %s12, 16, [#allocation3], [#allocation2]
  %15 = dma.done [#allocation2], 16
  %16 = sfence
  loop: start=0, step=1, limit=4
  $region2: #{_fused_forward.1} parent=0 // loop_pre_header
    _
  $region3: #{_fused_forward.1} parent=0 // loop_header
    %s18 = sphi 0, %s22
    %p19 = scmp.ge.s32.totalorder %s18, 4
    %s28 = sphi 0, %s30
    %s31 = sphi 0, %s28
    %s32 = sphi 0, %s31
    %s48 = sphi 0, %s32
    %s56 = sphi 0, %s58
    %s59 = sphi 0, %s56
    %s60 = sphi 0, %s59
    %s76 = sphi 0, %s60
    %s84 = sphi 0, %s86
    %s87 = sphi 0, %s84
    %s88 = sphi 0, %s87
    %s104 = sphi 0, %s88
    %s112 = sphi 0, %s114
    %s115 = sphi 0, %s112
    %s116 = sphi 0, %s115
    %s132 = sphi 0, %s116
    %s140 = sphi 0, %s142
    %s143 = sphi 0, %s140
    %s144 = sphi 0, %s143
    %s160 = sphi 0, %s144
    %s166 = sphi 0, %s168
    %s169 = sphi 0, %s166
    %s170 = sphi 0, %s169
    %s186 = sphi 0, %s170
  $region4: #{_fused_forward.1} parent=0 // loop_header_branch
    %21 = sbr.rel (%p19) target = $region8
  $region5: #{_fused_forward.1} parent=0 // loop_body
    %s23 = ssub.s32 %s18, 1
    %s24 = ssub.s32 %s18, 2
    %s25 = sadd.s32 %s18, 1
    %s26 = ssub.s32 %s18, %s25
    %p27 = scmp.eq.s32.totalorder %s26, 0
    %s29 = sadd.s32 %s28, 1
    %s30 = scalar_select %p27, %s28, %s29
    %p33 = pneg %p27
    %p34 = scmp.eq.s32.totalorder %s18, 1
    %p35 = por %p33, %p34
    %p36 = scmp.ne.s32.totalorder %s28, %s31
    %p37 = scmp.eq.s32.totalorder %s18, 0
    %p38 = por %p36, %p37
    %p39 = scmp.ne.s32.totalorder %s28, %s31
    %p40 = scmp.eq.s32.totalorder %s23, 1
    %p41 = por %p39, %p40
    %p42 = scmp.ne.s32.totalorder %s31, %s32
    %p43 = scmp.eq.s32.totalorder %s23, 0
    %p44 = por %p42, %p43
    %p45 = scmp.ne.s32.totalorder %s31, %s32
    %p46 = scmp.eq.s32.totalorder %s24, 1
    %p47 = por %p45, %p46
    %p49 = scmp.ne.s32.totalorder %s32, %s48
    %p50 = scmp.eq.s32.totalorder %s24, 0
    %p51 = por %p49, %p50
    %s52 = sld [smem:[#allocation3 + %s18]]
    %s53 = sld [smem:[#allocation3 + %s25]]
    %s54 = ssub.s32 %s52, %s53
    %p55 = scmp.eq.s32.totalorder %s54, 0
    %s57 = sadd.s32 %s56, 1
    %s58 = scalar_select %p55, %s56, %s57
    %p61 = pneg %p55
    %p62 = scmp.eq.s32.totalorder %s18, 1
    %p63 = por %p61, %p62
    %p64 = scmp.ne.s32.totalorder %s56, %s59
    %p65 = scmp.eq.s32.totalorder %s18, 0
    %p66 = por %p64, %p65
    %p67 = scmp.ne.s32.totalorder %s56, %s59
    %p68 = scmp.eq.s32.totalorder %s23, 1
    %p69 = por %p67, %p68
    %p70 = scmp.ne.s32.totalorder %s59, %s60
    %p71 = scmp.eq.s32.totalorder %s23, 0
    %p72 = por %p70, %p71
    %p73 = scmp.ne.s32.totalorder %s59, %s60
    %p74 = scmp.eq.s32.totalorder %s24, 1
    %p75 = por %p73, %p74
    %p77 = scmp.ne.s32.totalorder %s60, %s76
    %p78 = scmp.eq.s32.totalorder %s24, 0
    %p79 = por %p77, %p78
    %s80 = sld [smem:[#allocation3 + %s18]]
    %s81 = sld [smem:[#allocation3 + %s25]]
    %s82 = ssub.s32 %s80, %s81
    %p83 = scmp.eq.s32.totalorder %s82, 0
    %s85 = sadd.s32 %s84, 1
    %s86 = scalar_select %p83, %s84, %s85
    %p89 = pneg %p83
    %p90 = scmp.eq.s32.totalorder %s18, 1
    %p91 = por %p89, %p90
    %p92 = scmp.ne.s32.totalorder %s84, %s87
    %p93 = scmp.eq.s32.totalorder %s18, 0
    %p94 = por %p92, %p93
    %p95 = scmp.ne.s32.totalorder %s84, %s87
    %p96 = scmp.eq.s32.totalorder %s23, 1
    %p97 = por %p95, %p96
    %p98 = scmp.ne.s32.totalorder %s87, %s88
    %p99 = scmp.eq.s32.totalorder %s23, 0
    %p100 = por %p98, %p99
    %p101 = scmp.ne.s32.totalorder %s87, %s88
    %p102 = scmp.eq.s32.totalorder %s24, 1
    %p103 = por %p101, %p102
    %p105 = scmp.ne.s32.totalorder %s88, %s104
    %p106 = scmp.eq.s32.totalorder %s24, 0
    %p107 = por %p105, %p106
    %s108 = sld [smem:[#allocation3 + %s18]]
    %s109 = sld [smem:[#allocation3 + %s25]]
    %s110 = ssub.s32 %s108, %s109
    %p111 = scmp.eq.s32.totalorder %s110, 0
    %s113 = sadd.s32 %s112, 1
    %s114 = scalar_select %p111, %s112, %s113
    %p117 = pneg %p111
    %p118 = scmp.eq.s32.totalorder %s18, 1
    %p119 = por %p117, %p118
    %p120 = scmp.ne.s32.totalorder %s112, %s115
    %p121 = scmp.eq.s32.totalorder %s18, 0
    %p122 = por %p120, %p121
    %p123 = scmp.ne.s32.totalorder %s112, %s115
    %p124 = scmp.eq.s32.totalorder %s23, 1
    %p125 = por %p123, %p124
    %p126 = scmp.ne.s32.totalorder %s115, %s116
    %p127 = scmp.eq.s32.totalorder %s23, 0
    %p128 = por %p126, %p127
    %p129 = scmp.ne.s32.totalorder %s115, %s116
    %p130 = scmp.eq.s32.totalorder %s24, 1
    %p131 = por %p129, %p130
    %p133 = scmp.ne.s32.totalorder %s116, %s132
    %p134 = scmp.eq.s32.totalorder %s24, 0
    %p135 = por %p133, %p134
    %s136 = sld [smem:[#allocation3 + %s18]]
    %s137 = sld [smem:[#allocation3 + %s25]]
    %s138 = ssub.s32 %s136, %s137
    %p139 = scmp.eq.s32.totalorder %s138, 0
    %s141 = sadd.s32 %s140, 1
    %s142 = scalar_select %p139, %s140, %s141
    %p145 = pneg %p139
    %p146 = scmp.eq.s32.totalorder %s18, 1
    %p147 = por %p145, %p146
    %p148 = scmp.ne.s32.totalorder %s140, %s143
    %p149 = scmp.eq.s32.totalorder %s18, 0
    %p150 = por %p148, %p149
    %p151 = scmp.ne.s32.totalorder %s140, %s143
    %p152 = scmp.eq.s32.totalorder %s23, 1
    %p153 = por %p151, %p152
    %p154 = scmp.ne.s32.totalorder %s143, %s144
    %p155 = scmp.eq.s32.totalorder %s23, 0
    %p156 = por %p154, %p155
    %p157 = scmp.ne.s32.totalorder %s143, %s144
    %p158 = scmp.eq.s32.totalorder %s24, 1
    %p159 = por %p157, %p158
    %p161 = scmp.ne.s32.totalorder %s144, %s160
    %p162 = scmp.eq.s32.totalorder %s24, 0
    %p163 = por %p161, %p162
    %s164 = ssub.s32 %s18, %s25
    %p165 = scmp.eq.s32.totalorder %s164, 0
    %s167 = sadd.s32 %s166, 1
    %s168 = scalar_select %p165, %s166, %s167
    %p171 = pneg %p165
    %p172 = scmp.eq.s32.totalorder %s18, 1
    %p173 = por %p171, %p172
    %p174 = scmp.ne.s32.totalorder %s166, %s169
    %p175 = scmp.eq.s32.totalorder %s18, 0
    %p176 = por %p174, %p175
    %p177 = scmp.ne.s32.totalorder %s166, %s169
    %p178 = scmp.eq.s32.totalorder %s23, 1
    %p179 = por %p177, %p178
    %p180 = scmp.ne.s32.totalorder %s169, %s170
    %p181 = scmp.eq.s32.totalorder %s23, 0
    %p182 = por %p180, %p181
    %p183 = scmp.ne.s32.totalorder %s169, %s170
    %p184 = scmp.eq.s32.totalorder %s24, 1
    %p185 = por %p183, %p184
    %p187 = scmp.ne.s32.totalorder %s170, %s186
    %p188 = scmp.eq.s32.totalorder %s24, 0
    %p189 = por %p187, %p188
    %p190 = scmp.le.s32.totalorder 1, %s18
    %p191 = scmp.lt.s32.totalorder %s18, 3
    %p192 = pnand %p190, %p191
    %p193 = pneg %p192
    // Predicated region
    $region9: #{_fused_forward.1} parent=5 // pred_check
      _
    $region10: #{_fused_forward.1} parent=5 // pred_check_branch
      %195 = sbr.rel (%p192) target = $region12
    $region11: #{_fused_forward.1} parent=5 // pred_region
      %s196 = ssub.s32 %s18, 1
    $region12: #{_fused_forward.1} parent=5 // pred_fallthru
      _
    %p197 = scmp.lt.s32.totalorder %s18, 2
    // Predicated region
    $region13: #{_fused_forward.1} parent=5 // pred_check
      %p198 = pneg %p197
    $region14: #{_fused_forward.1} parent=5 // pred_check_branch
      %200 = sbr.rel (%p198) target = $region16
    $region15: #{_fused_forward.1} parent=5 // pred_region
      // Predicated region
      $region17: #{_fused_forward.1} parent=15 // pred_check
        %p201 = pneg %p38
      $region18: #{_fused_forward.1} parent=15 // pred_check_branch
        %203 = sbr.rel (%p201) target = $region20
      $region19: #{_fused_forward.1} parent=15 // pred_region
        %s204 = smul.u32 2, %s18
        %p205 = scmp.lt.s32.totalorder %s204, 3
        %s206 = scalar_select %p205, %s204, 3
        %s207 = smul.addr %s206, 4
        %s208 = scalar_lea.vmem %s1, %s207
        %s209 = smul.u32 2, %s18
      $region20: #{_fused_forward.1} parent=15 // pred_fallthru
        _
      // Predicated region
      $region21: #{_fused_forward.1} parent=15 // pred_check
        %p210 = pneg %p66
      $region22: #{_fused_forward.1} parent=15 // pred_check_branch
        %212 = sbr.rel (%p210) target = $region24
      $region23: #{_fused_forward.1} parent=15 // pred_region
        %s213 = sld [smem:[#allocation3 + %s18]]
        %p214 = scmp.lt.s32.totalorder %s213, 1
        %s215 = scalar_select %p214, %s213, 1
        %s216 = smul.addr %s215, 16
        %s217 = smul.addr %s216, 4
        %s218 = scalar_lea.vmem %s2, %s217
        %s219 = sld [smem:[#allocation3 + %s18]]
      $region24: #{_fused_forward.1} parent=15 // pred_fallthru
        _
      // Predicated region
      $region25: #{_fused_forward.1} parent=15 // pred_check
        %p220 = pneg %p94
      $region26: #{_fused_forward.1} parent=15 // pred_check_branch
        %222 = sbr.rel (%p220) target = $region28
      $region27: #{_fused_forward.1} parent=15 // pred_region
        %s223 = sld [smem:[#allocation3 + %s18]]
        %p224 = scmp.lt.s32.totalorder %s223, 1
        %s225 = scalar_select %p224, %s223, 1
        %s226 = scalar_lea.vmem %s3, %s225
        %s227 = sld [smem:[#allocation3 + %s18]]
      $region28: #{_fused_forward.1} parent=15 // pred_fallthru
        _
      // Predicated region
      $region29: #{_fused_forward.1} parent=15 // pred_check
        %p228 = pneg %p122
      $region30: #{_fused_forward.1} parent=15 // pred_check_branch
        %230 = sbr.rel (%p228) target = $region32
      $region31: #{_fused_forward.1} parent=15 // pred_region
        %s231 = sld [smem:[#allocation3 + %s18]]
        %p232 = scmp.lt.s32.totalorder %s231, 1
        %s233 = scalar_select %p232, %s231, 1
        %s234 = smul.addr %s233, 16
        %s235 = smul.addr %s234, 4
        %s236 = scalar_lea.vmem %s4, %s235
        %s237 = sld [smem:[#allocation3 + %s18]]
      $region32: #{_fused_forward.1} parent=15 // pred_fallthru
        _
      // Predicated region
      $region33: #{_fused_forward.1} parent=15 // pred_check
        %p238 = pneg %p150
      $region34: #{_fused_forward.1} parent=15 // pred_check_branch
        %240 = sbr.rel (%p238) target = $region36
      $region35: #{_fused_forward.1} parent=15 // pred_region
        %s241 = sld [smem:[#allocation3 + %s18]]
        %p242 = scmp.lt.s32.totalorder %s241, 1
        %s243 = scalar_select %p242, %s241, 1
        %s244 = scalar_lea.vmem %s5, %s243
        %s245 = sld [smem:[#allocation3 + %s18]]
      $region36: #{_fused_forward.1} parent=15 // pred_fallthru
        _
    $region16: #{_fused_forward.1} parent=5 // pred_fallthru
      _
    %p246 = scmp.le.s32.totalorder 1, %s18
    %p247 = scmp.lt.s32.totalorder %s18, 3
    %p248 = pnand %p246, %p247
    %p249 = pneg %p248
    // Predicated region
    $region37: #{_fused_forward.1} parent=5 // pred_check
      _
    $region38: #{_fused_forward.1} parent=5 // pred_check_branch
      %251 = sbr.rel (%p248) target = $region40
    $region39: #{_fused_forward.1} parent=5 // pred_region
      %s252 = ssub.s32 %s18, 1
      %s253 = smul.u32 2, %s23
      %p254 = scmp.lt.s32.totalorder %s253, 3
      %s255 = scalar_select %p254, %s253, 3
      %s256 = smul.addr %s255, 4
      %s257 = scalar_lea.vmem %s1, %s256
      %p258 = pneg %p44
      %p259 = pneg %p41
      %s260 = sld [smem:[#allocation3 + %s23]]
      %p261 = scmp.lt.s32.totalorder %s260, 1
      %s262 = scalar_select %p261, %s260, 1
      %s263 = smul.addr %s262, 16
      %s264 = smul.addr %s263, 4
      %s265 = scalar_lea.vmem %s2, %s264
      %p266 = pneg %p72
      %p267 = pneg %p69
      %s268 = sld [smem:[#allocation3 + %s23]]
      %p269 = scmp.lt.s32.totalorder %s268, 1
      %s270 = scalar_select %p269, %s268, 1
      %s271 = scalar_lea.vmem %s3, %s270
      %p272 = pneg %p100
      %p273 = pneg %p97
      %s274 = sld [smem:[#allocation3 + %s23]]
      %p275 = scmp.lt.s32.totalorder %s274, 1
      %s276 = scalar_select %p275, %s274, 1
      %s277 = smul.addr %s276, 16
      %s278 = smul.addr %s277, 4
      %s279 = scalar_lea.vmem %s4, %s278
      %p280 = pneg %p128
      %p281 = pneg %p125
      %s282 = sld [smem:[#allocation3 + %s23]]
      %p283 = scmp.lt.s32.totalorder %s282, 1
      %s284 = scalar_select %p283, %s282, 1
      %s285 = scalar_lea.vmem %s5, %s284
      %p286 = pneg %p156
      %p287 = pneg %p153
      %p288 = pneg %p182
      %p289 = pneg %p179
      %s290 = smul.u32 2, %s23
      %p291 = scmp.lt.s32.totalorder %s290, 3
      %s292 = scalar_select %p291, %s290, 3
      %s293 = smul.addr %s292, 8
      %s294 = scalar_lea.vmem %s6, %s293
      %s295 = smul.u32 2, %s23
      %p296 = scmp.lt.s32.totalorder %s295, 3
      %s297 = scalar_select %p296, %s295, 3
      %s298 = smul.addr %s297, 4
      %s299 = scalar_lea.vmem %s1, %s298
      %s300 = smul.u32 2, %s23
      %s301 = sld [smem:[#allocation3 + %s23]]
      %p302 = scmp.lt.s32.totalorder %s301, 1
      %s303 = scalar_select %p302, %s301, 1
      %s304 = smul.addr %s303, 16
      %s305 = smul.addr %s304, 4
      %s306 = scalar_lea.vmem %s2, %s305
      %s307 = sld [smem:[#allocation3 + %s23]]
      %s308 = sld [smem:[#allocation3 + %s23]]
      %p309 = scmp.lt.s32.totalorder %s308, 1
      %s310 = scalar_select %p309, %s308, 1
      %s311 = scalar_lea.vmem %s3, %s310
      %s312 = sld [smem:[#allocation3 + %s23]]
      %s313 = sld [smem:[#allocation3 + %s23]]
      %p314 = scmp.lt.s32.totalorder %s313, 1
      %s315 = scalar_select %p314, %s313, 1
      %s316 = smul.addr %s315, 16
      %s317 = smul.addr %s316, 4
      %s318 = scalar_lea.vmem %s4, %s317
      %s319 = sld [smem:[#allocation3 + %s23]]
      %s320 = sld [smem:[#allocation3 + %s23]]
      %p321 = scmp.lt.s32.totalorder %s320, 1
      %s322 = scalar_select %p321, %s320, 1
      %s323 = scalar_lea.vmem %s5, %s322
      %s324 = sld [smem:[#allocation3 + %s23]]
      %s325 = smul.u32 2, %s23
      %p326 = scmp.lt.s32.totalorder %s325, 3
      %s327 = scalar_select %p326, %s325, 3
      %s328 = smul.addr %s327, 8
      %s329 = scalar_lea.vmem %s6, %s328
      %s330 = smul.u32 2, %s23
      %v332 = vld [vmem:[%s299] sm:$0xf]
      %v333 = vld [vmem:[%s299 + $0x4] sm:$0xf]
      %v334 = vld [vmem:[%s306] sm:$0xf]
      %v335 = vld [vmem:[%s306 + $0x4] sm:$0xf]
      %v336 = vld [vmem:[%s306 + $0x8] sm:$0xf]
      %v337 = vld [vmem:[%s306 + $0xc] sm:$0xf]
      %v338 = vld [vmem:[%s306 + $0x10] sm:$0xf]
      %v339 = vld [vmem:[%s306 + $0x14] sm:$0xf]
      %v340 = vld [vmem:[%s306 + $0x18] sm:$0xf]
      %v341 = vld [vmem:[%s306 + $0x1c] sm:$0xf]
      %v342 = vld [vmem:[%s306 + $0x20] sm:$0xf]
      %v343 = vld [vmem:[%s306 + $0x24] sm:$0xf]
      %v344 = vld [vmem:[%s306 + $0x28] sm:$0xf]
      %v345 = vld [vmem:[%s306 + $0x2c] sm:$0xf]
      %v346 = vld [vmem:[%s306 + $0x30] sm:$0xf]
      %v347 = vld [vmem:[%s306 + $0x34] sm:$0xf]
      %v348 = vld [vmem:[%s306 + $0x38] sm:$0xf]
      %v349 = vld [vmem:[%s306 + $0x3c] sm:$0xf]
      %v350 = vld [vmem:[%s311] sm:$0x1]
      %v352 = vlaneseq
      %v353 = vshrl.u32 %v352, 7
      %v354 = vsub.s32 0, %v353
      %v355 = vrot.slane %v350, %v354
      %v359 = vunpack.c.l.b16 %v332
      %v360 = vunpack.c.l.b16 %v333
      %v361 = vpack.c.b16 %v360, %v359
      %v379 = vunpack.c.l.b16 %v334
      %v380 = vunpack.c.l.b16 %v335
      %v381 = vunpack.c.l.b16 %v336
      %v382 = vunpack.c.l.b16 %v337
      %v383 = vunpack.c.l.b16 %v338
      %v384 = vunpack.c.l.b16 %v339
      %v385 = vunpack.c.l.b16 %v340
      %v386 = vunpack.c.l.b16 %v341
      %v387 = vunpack.c.l.b16 %v342
      %v388 = vunpack.c.l.b16 %v343
      %v389 = vunpack.c.l.b16 %v344
      %v390 = vunpack.c.l.b16 %v345
      %v391 = vunpack.c.l.b16 %v346
      %v392 = vunpack.c.l.b16 %v347
      %v393 = vunpack.c.l.b16 %v348
      %v394 = vunpack.c.l.b16 %v349
      %v395 = vpack.c.b16 %v380, %v379
      %v396 = vpack.c.b16 %v382, %v381
      %v397 = vpack.c.b16 %v384, %v383
      %v398 = vpack.c.b16 %v386, %v385
      %v399 = vpack.c.b16 %v388, %v387
      %v400 = vpack.c.b16 %v390, %v389
      %v401 = vpack.c.b16 %v392, %v391
      %v402 = vpack.c.b16 %v394, %v393
      %411 = vmatprep.subr.bf16.mxu0 0
      %412 = vmatpush1.bf16.msra.mxu0 %v395
      %413 = vmatprep.subr.bf16.mxu0 0
      %414 = vmatpush1.bf16.msra.mxu0 %v396
      %415 = vmatprep.subr.bf16.mxu0 0
      %416 = vmatpush1.bf16.msra.mxu0 %v397
      %417 = vmatprep.subr.bf16.mxu0 0
      %418 = vmatpush1.bf16.msra.mxu0 %v398
      %419 = vmatprep.subr.bf16.mxu0 0
      %420 = vmatpush1.bf16.msra.mxu0 %v399
      %421 = vmatprep.subr.bf16.mxu0 0
      %422 = vmatpush1.bf16.msra.mxu0 %v400
      %423 = vmatprep.subr.bf16.mxu0 0
      %424 = vmatpush1.bf16.msra.mxu0 %v401
      %425 = vmatprep.subr.bf16.mxu0 0
      %426 = vmatpush1.bf16.msra.mxu0 %v402
      %427 = vmatprep.subr.bf16.mxu0 0
      %428 = vmatpush1.bf16.msra.mxu0 0
      %429 = vmatprep.subr.bf16.mxu0 0
      %430 = vmatpush1.bf16.msra.mxu0 0
      %431 = vmatprep.subr.bf16.mxu0 0
      %432 = vmatpush1.bf16.msra.mxu0 0
      %433 = vmatprep.subr.bf16.mxu0 0
      %434 = vmatpush1.bf16.msra.mxu0 0
      %435 = vmatprep.subr.bf16.mxu0 0
      %436 = vmatpush1.bf16.msra.mxu0 0
      %437 = vmatprep.subr.bf16.mxu0 0
      %438 = vmatpush1.bf16.msra.mxu0 0
      %439 = vmatprep.subr.bf16.mxu0 0
      %440 = vmatpush1.bf16.msra.mxu0 0
      %441 = vmatprep.subr.bf16.mxu0 0
      %442 = vmatpush1.bf16.msra.mxu0 0
      %443 = vmatprep.mubr.bf16.mxu0 0
      %444 = vmatmul.mubr.bf16.gmra.mrb[0].mxu0 %v361
      %v445 = vpop.f32.mrb[0].mxu0
      %v446 = vadd.f32 %v355, %v445
      %v447 = vpop.f32.mrb[0].mxu0
      %v448 = vpop.f32.mrb[0].mxu0
      %v449 = vadd.f32 %v355, %v448
      %v450 = vpop.f32.mrb[0].mxu0
      %451 = vdwg.mxu0
      %v452 = vmax.f32 %v446, 0.0
      %v453 = vmax.f32 %v449, 0.0
      %v454 = vpack.c.bf16 %v453, %v452
      %v455 = vld [vmem:[%s318] sm:$0xf]
      %v456 = vld [vmem:[%s318 + $0x4] sm:$0xf]
      %v457 = vld [vmem:[%s318 + $0x8] sm:$0xf]
      %v458 = vld [vmem:[%s318 + $0xc] sm:$0xf]
      %v459 = vld [vmem:[%s318 + $0x10] sm:$0xf]
      %v460 = vld [vmem:[%s318 + $0x14] sm:$0xf]
      %v461 = vld [vmem:[%s318 + $0x18] sm:$0xf]
      %v462 = vld [vmem:[%s318 + $0x1c] sm:$0xf]
      %v463 = vld [vmem:[%s318 + $0x20] sm:$0xf]
      %v464 = vld [vmem:[%s318 + $0x24] sm:$0xf]
      %v465 = vld [vmem:[%s318 + $0x28] sm:$0xf]
      %v466 = vld [vmem:[%s318 + $0x2c] sm:$0xf]
      %v467 = vld [vmem:[%s318 + $0x30] sm:$0xf]
      %v468 = vld [vmem:[%s318 + $0x34] sm:$0xf]
      %v469 = vld [vmem:[%s318 + $0x38] sm:$0xf]
      %v470 = vld [vmem:[%s318 + $0x3c] sm:$0xf]
      %v471 = vld [vmem:[%s323] sm:$0x1]
      %v473 = vlaneseq
      %v474 = vshrl.u32 %v473, 7
      %v475 = vsub.s32 0, %v474
      %v476 = vrot.slane %v471, %v475
      %v494 = vunpack.c.l.b16 %v455
      %v495 = vunpack.c.l.b16 %v456
      %v496 = vunpack.c.l.b16 %v457
      %v497 = vunpack.c.l.b16 %v458
      %v498 = vunpack.c.l.b16 %v459
      %v499 = vunpack.c.l.b16 %v460
      %v500 = vunpack.c.l.b16 %v461
      %v501 = vunpack.c.l.b16 %v462
      %v502 = vunpack.c.l.b16 %v463
      %v503 = vunpack.c.l.b16 %v464
      %v504 = vunpack.c.l.b16 %v465
      %v505 = vunpack.c.l.b16 %v466
      %v506 = vunpack.c.l.b16 %v467
      %v507 = vunpack.c.l.b16 %v468
      %v508 = vunpack.c.l.b16 %v469
      %v509 = vunpack.c.l.b16 %v470
      %v510 = vpack.c.b16 %v495, %v494
      %v511 = vpack.c.b16 %v497, %v496
      %v512 = vpack.c.b16 %v499, %v498
      %v513 = vpack.c.b16 %v501, %v500
      %v514 = vpack.c.b16 %v503, %v502
      %v515 = vpack.c.b16 %v505, %v504
      %v516 = vpack.c.b16 %v507, %v506
      %v517 = vpack.c.b16 %v509, %v508
      %526 = vmatprep.subr.bf16.mxu0 0
      %527 = vmatpush1.bf16.msra.mxu0 %v510
      %528 = vmatprep.subr.bf16.mxu0 0
      %529 = vmatpush1.bf16.msra.mxu0 %v511
      %530 = vmatprep.subr.bf16.mxu0 0
      %531 = vmatpush1.bf16.msra.mxu0 %v512
      %532 = vmatprep.subr.bf16.mxu0 0
      %533 = vmatpush1.bf16.msra.mxu0 %v513
      %534 = vmatprep.subr.bf16.mxu0 0
      %535 = vmatpush1.bf16.msra.mxu0 %v514
      %536 = vmatprep.subr.bf16.mxu0 0
      %537 = vmatpush1.bf16.msra.mxu0 %v515
      %538 = vmatprep.subr.bf16.mxu0 0
      %539 = vmatpush1.bf16.msra.mxu0 %v516
      %540 = vmatprep.subr.bf16.mxu0 0
      %541 = vmatpush1.bf16.msra.mxu0 %v517
      %542 = vmatprep.subr.bf16.mxu0 0
      %543 = vmatpush1.bf16.msra.mxu0 0
      %544 = vmatprep.subr.bf16.mxu0 0
      %545 = vmatpush1.bf16.msra.mxu0 0
      %546 = vmatprep.subr.bf16.mxu0 0
      %547 = vmatpush1.bf16.msra.mxu0 0
      %548 = vmatprep.subr.bf16.mxu0 0
      %549 = vmatpush1.bf16.msra.mxu0 0
      %550 = vmatprep.subr.bf16.mxu0 0
      %551 = vmatpush1.bf16.msra.mxu0 0
      %552 = vmatprep.subr.bf16.mxu0 0
      %553 = vmatpush1.bf16.msra.mxu0 0
      %554 = vmatprep.subr.bf16.mxu0 0
      %555 = vmatpush1.bf16.msra.mxu0 0
      %556 = vmatprep.subr.bf16.mxu0 0
      %557 = vmatpush1.bf16.msra.mxu0 0
      %558 = vmatprep.mubr.bf16.mxu0 0
      %559 = vmatmul.mubr.bf16.gmra.mrb[0].mxu0 %v454
      %v560 = vpop.f32.mrb[0].mxu0
      %v561 = vadd.f32 %v476, %v560
      %v562 = vpop.f32.mrb[0].mxu0
      %v563 = vpop.f32.mrb[0].mxu0
      %v564 = vadd.f32 %v476, %v563
      %v565 = vpop.f32.mrb[0].mxu0
      %566 = vdwg.mxu0
      %v567 = vmul.f32 %v561, %v561
      %v568 = vmul.f32 %v564, %v564
      %569 = vadd.xlane.f32.xlu0 %v567
      %v570 = vpop.xlane.xlu0 %569
      %571 = vadd.xlane.f32.xlu0 %v568
      %v572 = vpop.xlane.xlu0 %571
      %v573 = vrsqrt.pop %v570
      %v574 = vmul.f32 %v570, %v573
      %vm575 = vcmp.eq.f32.partialorder %v570, inf
      %v576 = vsel %vm575, %v570, %v574
      %vm577 = vcmp.eq.f32.partialorder %v570, 0.0
      %v578 = vand.u32 %v570, 2147483648
      %v579 = vsel %vm577, %v578, %v576
      %v580 = vrsqrt.pop %v572
      %v581 = vmul.f32 %v572, %v580
      %vm582 = vcmp.eq.f32.partialorder %v572, inf
      %v583 = vsel %vm582, %v572, %v581
      %vm584 = vcmp.eq.f32.partialorder %v572, 0.0
      %v585 = vand.u32 %v572, 2147483648
      %v586 = vsel %vm584, %v585, %v583
      %v587 = vadd.f32 %v579, 1e-07
      %v588 = vadd.f32 %v586, 1e-07
      %v589 = vrcp.pop %v587
      %v590 = vrcp.pop %v588
      %v591 = vmul.f32 %v587, %v589
      %v592 = vmul.f32 %v588, %v590
      %v593 = vsub.f32 2.0, %v591
      %v594 = vsub.f32 2.0, %v592
      %v595 = vmul.f32 %v589, %v593
      %v596 = vmul.f32 %v590, %v594
      %v597 = vmul.f32 %v561, %v595
      %v598 = vmul.f32 %v564, %v596
      %599 = vst [vmem:[%s329] sm:$0xff] %v597
      %600 = vst [vmem:[%s329 + $0x8] sm:$0xff] %v598
      %s601 = smul.u32 2, %s23
      %p602 = scmp.lt.s32.totalorder %s601, 3
      %s603 = scalar_select %p602, %s601, 3
      %s604 = smul.addr %s603, 8
      %s605 = scalar_lea.vmem %s6, %s604
      // Predicated region
      $region41: #{_fused_forward.1} parent=39 // pred_check
        %p606 = pneg %p179
      $region42: #{_fused_forward.1} parent=39 // pred_check_branch
        %608 = sbr.rel (%p606) target = $region44
      $region43: #{_fused_forward.1} parent=39 // pred_region
        %s609 = smul.u32 2, %s23
      $region44: #{_fused_forward.1} parent=39 // pred_fallthru
        _
    $region40: #{_fused_forward.1} parent=5 // pred_fallthru
      _
    %p610 = scmp.le.s32.totalorder 2, %s18
    // Predicated region
    $region45: #{_fused_forward.1} parent=5 // pred_check
      %p611 = pneg %p610
    $region46: #{_fused_forward.1} parent=5 // pred_check_branch
      %613 = sbr.rel (%p611) target = $region48
    $region47: #{_fused_forward.1} parent=5 // pred_region
      %s614 = ssub.s32 %s18, 2
      // Predicated region
      $region49: #{_fused_forward.1} parent=47 // pred_check
        %p615 = pneg %p185
      $region50: #{_fused_forward.1} parent=47 // pred_check_branch
        %617 = sbr.rel (%p615) target = $region52
      $region51: #{_fused_forward.1} parent=47 // pred_region
        %s618 = smul.u32 2, %s24
        %p619 = scmp.lt.s32.totalorder %s618, 3
        %s620 = scalar_select %p619, %s618, 3
        %s621 = smul.addr %s620, 8
        %s622 = scalar_lea.vmem %s6, %s621
      $region52: #{_fused_forward.1} parent=47 // pred_fallthru
        _
    $region48: #{_fused_forward.1} parent=5 // pred_fallthru
      _
  $region6: #{_fused_forward.1} parent=0 // loop_footer
    %s22 = sadd.s32 1, %s18
  $region7: #{_fused_forward.1} parent=0 // loop_footer_branch
    %17 = sbr.rel target = $region3
  $region8: #{_fused_forward.1} parent=0 // loop_exit
    _

</llo_original>
